<compile_context>
chip_gen: v5e
topology: v5e:2x2
jax: 0.10.0
libtpu: 0.0.40
codegen_flags: <defaults>
</compile_context>

<pallas_src>
import functools

import jax
import jax.numpy as jnp
from jax.experimental import pallas as pl
from jax.experimental.pallas import tpu as pltpu

LANE = 128
SUBLANE = 8


def _round_up(n, m):
    return (n + m - 1) // m * m


# ------------------------------ Pallas kernel -------------------------------

def _mlp_kernel(x_ref, w1_ref, b1_ref, w2_ref, b2_ref, o_ref):
    # x: (B, D) f32   w1: (D, H) bf16   b1: (1, H) f32
    # w2: (H, C) bf16 b2: (1, C) f32    o: (B, C) f32
    # bf16 operands -> single-pass MXU; f32 accumulate; f32 epilogue.
    h = jnp.dot(x_ref[...].astype(jnp.bfloat16), w1_ref[...],
                preferred_element_type=jnp.float32)
    h = jnp.maximum(h + b1_ref[...], 0.0)                       # fc1 + ReLU (f32)
    y = jnp.dot(h.astype(jnp.bfloat16), w2_ref[...],
                preferred_element_type=jnp.float32)
    o_ref[...] = (y + b2_ref[...]).astype(o_ref.dtype)          # fc2 (f32)


# ------------------------- one-time parameter prep ---------------------------

def prepare_params(params):
    """Transpose, zero-pad to lane/sublane-dense shapes, cast weights to bf16.

    Run ONCE (outside the per-call forward).  Zero padding is inert:
    padded hidden units have zero weights + zero bias (ReLU(0)=0) and feed
    zero weights downstream; padded classes are sliced off after the call.
    """
    w1, b1 = params["w1"], params["b1"]      # torch layout: (H, D), (H,)
    w2, b2 = params["w2"], params["b2"]      # (C, H), (C,)
    H, D = w1.shape
    C = w2.shape[0]
    Dp = _round_up(D, LANE)
    Hp = _round_up(H, LANE)
    Cp = _round_up(C, LANE)

    w1p = jnp.zeros((Dp, Hp), jnp.bfloat16).at[:D, :H].set(
        w1.T.astype(jnp.bfloat16))
    b1p = jnp.zeros((1, Hp), jnp.float32).at[0, :H].set(b1)
    w2p = jnp.zeros((Hp, Cp), jnp.bfloat16).at[:H, :C].set(
        w2.T.astype(jnp.bfloat16))
    b2p = jnp.zeros((1, Cp), jnp.float32).at[0, :C].set(b2)

    return {"w1p": w1p, "b1p": b1p, "w2p": w2p, "b2p": b2p,
            "D": D, "H": H, "C": C, "Dp": Dp, "Hp": Hp, "Cp": Cp}


# --------------------------------- forward -----------------------------------

def mlp_forward(x, prep):
    """x: (B, input_size) f32.  prep: output of prepare_params (pre-packed)."""
    B, D = x.shape
    assert D == prep["D"], (D, prep["D"])
    Dp, Hp, Cp, C = prep["Dp"], prep["Hp"], prep["Cp"], prep["C"]
    Bp = _round_up(max(B, SUBLANE), SUBLANE)

    # Pad x only when actually needed (Python-level shape check, no traced op
    # when B % 8 == 0 and D % 128 == 0).
    if (Bp != B) or (Dp != D):
        xp = jnp.zeros((Bp, Dp), x.dtype).at[:B, :D].set(x)
    else:
        xp = x

    vmem = pltpu.MemorySpace.VMEM
    out = pl.pallas_call(
        _mlp_kernel,
        out_shape=jax.ShapeDtypeStruct((Bp, Cp), jnp.float32),
        # No grid: full-array VMEM-resident operands, no pipeline bookkeeping.
        in_specs=[
            pl.BlockSpec(memory_space=vmem),   # x
            pl.BlockSpec(memory_space=vmem),   # w1 (bf16)
            pl.BlockSpec(memory_space=vmem),   # b1
            pl.BlockSpec(memory_space=vmem),   # w2 (bf16)
            pl.BlockSpec(memory_space=vmem),   # b2
        ],
        out_specs=pl.BlockSpec(memory_space=vmem),
    )(xp, prep["w1p"], prep["b1p"], prep["w2p"], prep["b2p"])

    if (Bp != B) or (Cp != C):
        out = out[:B, :C]
    return out


# --------------------------- reference (pure JAX) ----------------------------

def reference_forward(x, p):
    h = jnp.maximum(x @ p["w1"].T + p["b1"], 0.0)
    return h @ p["w2"].T + p["b2"]


# ----------------------------------- main ------------------------------------

if __name__ == "__main__":
    key = jax.random.PRNGKey(0)
    kx, k1, k2, k3, k4 = jax.random.split(key, 5)

    B, input_size, hidden_size, num_classes = 8, 256, 128, 10
    x = jax.random.normal(kx, (B, input_size), jnp.float32)
    params = {
        # torch nn.Linear layout: weight (out_features, in_features), bias (out,)
        "w1": 0.06 * jax.random.normal(k1, (hidden_size, input_size), jnp.float32),
        "b1": 0.10 * jax.random.normal(k2, (hidden_size,), jnp.float32),
        "w2": 0.09 * jax.random.normal(k3, (num_classes, hidden_size), jnp.float32),
        "b2": 0.10 * jax.random.normal(k4, (num_classes,), jnp.float32),
    }

    # One-time packing (transpose + pad + bf16 cast) outside the hot path.
    prep = jax.tree.map(jax.block_until_ready,
                        {k: v for k, v in prepare_params(params).items()
                         if hasattr(v, "dtype")}) | {
        k: v for k, v in prepare_params(params).items() if not hasattr(v, "dtype")}

    fwd = jax.jit(functools.partial(mlp_forward, prep=prep))
    out = jax.block_until_ready(fwd(x))

    ref = reference_forward(x, params)
    assert out.shape == (B, num_classes), out.shape
    # bf16 MXU operands vs f32 reference; real bugs (wrong transpose / missing
    # bias) produce errors >> 1e-2.
    assert jnp.allclose(out, ref, atol=1e-2, rtol=1e-2), (
        "mismatch", float(jnp.max(jnp.abs(out - ref))))
    print("KERNEL_OK")
</pallas_src>

<mosaic_0001>
module attributes {stable_mosaic.version = 11 : i64} {
  func.func @_mlp_kernel(%arg0: memref<8x256xf32, #tpu.memory_space<vmem>>, %arg1: memref<256x128xbf16, #tpu.memory_space<vmem>>, %arg2: memref<1x128xf32, #tpu.memory_space<vmem>>, %arg3: memref<128x128xbf16, #tpu.memory_space<vmem>>, %arg4: memref<1x128xf32, #tpu.memory_space<vmem>>, %arg5: memref<8x128xf32, #tpu.memory_space<vmem>>) attributes {dimension_semantics = [], scalar_prefetch = 0 : i64, scratch_operands = 0 : i64, tpu.core_type = #tpu.core_type<tc>} {
    %c0 = arith.constant 0 : index
    %c0_0 = arith.constant 0 : index
    %0 = vector.load %arg0[%c0, %c0_0] : memref<8x256xf32, #tpu.memory_space<vmem>>, vector<8x256xf32>
    %1 = arith.truncf %0 : vector<8x256xf32> to vector<8x256xbf16>
    %c0_1 = arith.constant 0 : index
    %c0_2 = arith.constant 0 : index
    %2 = vector.load %arg1[%c0_1, %c0_2] : memref<256x128xbf16, #tpu.memory_space<vmem>>, vector<256x128xbf16>
    %cst = arith.constant dense<0.000000e+00> : vector<8x128xf32>
    %3 = tpu.matmul %1, %2, %cst {dimension_numbers = #tpu.dot_dimension_numbers<[1], [0], [0], [1], [0, 0, 1, 1], [], []>} : vector<8x256xbf16>, vector<256x128xbf16>, vector<8x128xf32> -> vector<8x128xf32>
    %c0_3 = arith.constant 0 : index
    %c0_4 = arith.constant 0 : index
    %4 = vector.load %arg2[%c0_3, %c0_4] : memref<1x128xf32, #tpu.memory_space<vmem>>, vector<1x128xf32>
    %5 = vector.broadcast %4 : vector<1x128xf32> to vector<8x128xf32>
    %6 = arith.addf %3, %5 : vector<8x128xf32>
    %cst_5 = arith.constant 0.000000e+00 : f32
    %7 = vector.broadcast %cst_5 : f32 to vector<8x128xf32>
    %8 = arith.maximumf %6, %7 : vector<8x128xf32>
    %9 = arith.truncf %8 : vector<8x128xf32> to vector<8x128xbf16>
    %c0_6 = arith.constant 0 : index
    %c0_7 = arith.constant 0 : index
    %10 = vector.load %arg3[%c0_6, %c0_7] : memref<128x128xbf16, #tpu.memory_space<vmem>>, vector<128x128xbf16>
    %cst_8 = arith.constant dense<0.000000e+00> : vector<8x128xf32>
    %11 = tpu.matmul %9, %10, %cst_8 {dimension_numbers = #tpu.dot_dimension_numbers<[1], [0], [0], [1], [0, 0, 1, 1], [], []>} : vector<8x128xbf16>, vector<128x128xbf16>, vector<8x128xf32> -> vector<8x128xf32>
    %c0_9 = arith.constant 0 : index
    %c0_10 = arith.constant 0 : index
    %12 = vector.load %arg4[%c0_9, %c0_10] : memref<1x128xf32, #tpu.memory_space<vmem>>, vector<1x128xf32>
    %13 = vector.broadcast %12 : vector<1x128xf32> to vector<8x128xf32>
    %14 = arith.addf %11, %13 : vector<8x128xf32>
    %c0_11 = arith.constant 0 : index
    %c0_12 = arith.constant 0 : index
    %15 = vector.load %arg5[%c0_11, %c0_12] : memref<8x128xf32, #tpu.memory_space<vmem>>, vector<8x128xf32>
    tpu.vector_store %arg5[%c0_11, %c0_12], %14 {strides = array<i32>} : memref<8x128xf32, #tpu.memory_space<vmem>>, vector<8x128xf32>,
    return
  }
}

</mosaic_0001>

<llo_original>
// kernel: mlp_forward.1
$region0: #{mlp_forward.1}
  #allocation0 [shape = 'u32[]', space=smem, size = 0x4, offset = 0x4, fixed_abs, tag = 'smem constant byte address 0x4 - core index']
  #allocation1 [shape = 'u32[72,128]{1,0:T(1,128)}', space=vmem, size = 0x9000, scoped, tag = 'internal scratch']
  %s0 = inlined_call_operand.hbm [shape: f32[8,256], index: 0, kind: input, shape index: {}]
  %s1 = inlined_call_operand.hbm [shape: bf16[256,128], index: 1, kind: input, shape index: {}]
  %s2 = inlined_call_operand.hbm [shape: f32[1,128], index: 2, kind: input, shape index: {}]
  %s3 = inlined_call_operand.hbm [shape: bf16[128,128], index: 3, kind: input, shape index: {}]
  %s4 = inlined_call_operand.vmem [shape: f32[1,128], index: 4, kind: input, shape index: {}]
  %s5 = inlined_call_operand.hbm [shape: f32[8,128], index: 5, kind: output, shape index: {}]
  %s6 = sld [smem:[#allocation0]]
  $region46: #{mlp_forward.1} parent=0
    _
  %s8 = ssub.s32 1, %s6
  %s9 = scalar_select 0, %s8, %s6
  $region1: #{mlp_forward.1} parent=0
    #allocation2 [shape = 'u8[8192]{0}', space=vmem, size = 0x2000, scoped, tag = 'input window, operand 0, single buffered']
    #allocation3 [shape = 's32[1]{0}', space=sflag, size = 0x4, scoped, tag = 'scoped memory for mlp_forward.1']
    #allocation4 [shape = 's32[1]{0}', space=sflag, size = 0x4, scoped, tag = 'scoped memory for mlp_forward.1']
    #allocation5 [shape = 'u8[65536]{0}', space=vmem, size = 0x10000, scoped, tag = 'input window, operand 1, single buffered']
    #allocation6 [shape = 's32[1]{0}', space=sflag, size = 0x4, scoped, tag = 'scoped memory for mlp_forward.1']
    #allocation7 [shape = 'u8[512]{0}', space=vmem, size = 0x400, scoped, tag = 'input window, operand 2, single buffered']
    #allocation8 [shape = 'u8[32768]{0}', space=vmem, size = 0x8000, scoped, tag = 'input window, operand 3, single buffered']
    #allocation9 [shape = 's32[1]{0}', space=sflag, size = 0x4, scoped, tag = 'scoped memory for mlp_forward.1']
    #allocation10 [shape = 'u8[4096]{0}', space=vmem, size = 0x1000, scoped, tag = 'output window, operand 0, single buffered']
    %10 = vsyncpa [#allocation3], 0
    %11 = vsyncpa [#allocation6], 0
    %12 = vsyncpa [#allocation9], 0
    %13 = vsyncpa [#allocation4], 0
    // Predicated region
    $region2: #{mlp_forward.1} parent=1 // pred_check
      _
    $region3: #{mlp_forward.1} parent=1 // pred_check_branch
      %15 = sbr.rel (0) target = $region5
    $region4: #{mlp_forward.1} parent=1 // pred_region
      %17 = vsyncadd [#allocation3], 0
      %s19 = sshll.u32 %s0, 4
      %s20 = int_to_ptr.hbm [resolvable:$true] %s19
      %s21 = sshll.u32 [#allocation2], 4
      %s22 = int_to_ptr.vmem [resolvable:$true] %s21
      %24 = dma.hbm_to_vmem [thread:$0]  %s20, 256, %s22, [#allocation3]
    $region5: #{mlp_forward.1} parent=1 // pred_fallthru
      _
    // Predicated region
    $region6: #{mlp_forward.1} parent=1 // pred_check
      _
    $region7: #{mlp_forward.1} parent=1 // pred_check_branch
      %26 = sbr.rel (0) target = $region9
    $region8: #{mlp_forward.1} parent=1 // pred_region
      %28 = vsyncadd [#allocation6], 0
      %s29 = sshll.u32 %s1, 4
      %s30 = int_to_ptr.hbm [resolvable:$true] %s29
      %s31 = sshll.u32 [#allocation5], 4
      %s32 = int_to_ptr.vmem [resolvable:$true] %s31
      %37 = dma.hbm_to_vmem [thread:$0]  %s30, 2048, %s32, [#allocation6], 64, 64, 4
    $region9: #{mlp_forward.1} parent=1 // pred_fallthru
      _
    // Predicated region
    $region10: #{mlp_forward.1} parent=1 // pred_check
      _
    $region11: #{mlp_forward.1} parent=1 // pred_check_branch
      %39 = sbr.rel (0) target = $region13
    $region12: #{mlp_forward.1} parent=1 // pred_region
      %41 = vsyncadd [#allocation6], 0
      %s43 = sshll.u32 %s2, 4
      %s44 = int_to_ptr.hbm [resolvable:$true] %s43
      %s45 = sshll.u32 [#allocation7], 4
      %s46 = int_to_ptr.vmem [resolvable:$true] %s45
      %48 = dma.hbm_to_vmem [thread:$0]  %s44, 16, %s46, [#allocation6]
    $region13: #{mlp_forward.1} parent=1 // pred_fallthru
      _
    // Predicated region
    $region14: #{mlp_forward.1} parent=1 // pred_check
      _
    $region15: #{mlp_forward.1} parent=1 // pred_check_branch
      %50 = sbr.rel (0) target = $region17
    $region16: #{mlp_forward.1} parent=1 // pred_region
      %52 = vsyncadd [#allocation9], 0
      %s53 = sshll.u32 %s3, 4
      %s54 = int_to_ptr.hbm [resolvable:$true] %s53
      %s55 = sshll.u32 [#allocation8], 4
      %s56 = int_to_ptr.vmem [resolvable:$true] %s55
      %61 = dma.hbm_to_vmem [thread:$0]  %s54, 1024, %s56, [#allocation9], 64, 64, 4
    $region17: #{mlp_forward.1} parent=1 // pred_fallthru
      _
    // Predicated region
    $region18: #{mlp_forward.1} parent=1 // pred_check
      _
    $region19: #{mlp_forward.1} parent=1 // pred_check_branch
      %63 = sbr.rel (0) target = $region21
    $region20: #{mlp_forward.1} parent=1 // pred_region
      _
    $region21: #{mlp_forward.1} parent=1 // pred_fallthru
      _
    // Predicated region
    $region22: #{mlp_forward.1} parent=1 // pred_check
      _
    $region23: #{mlp_forward.1} parent=1 // pred_check_branch
      %65 = sbr.rel (0) target = $region25
    $region24: #{mlp_forward.1} parent=1 // pred_region
      %67 = dma.done [#allocation3], 256
    $region25: #{mlp_forward.1} parent=1 // pred_fallthru
      _
    // Predicated region
    $region26: #{mlp_forward.1} parent=1 // pred_check
      _
    $region27: #{mlp_forward.1} parent=1 // pred_check_branch
      %69 = sbr.rel (0) target = $region29
    $region28: #{mlp_forward.1} parent=1 // pred_region
      %71 = dma.done [#allocation6], 2048
    $region29: #{mlp_forward.1} parent=1 // pred_fallthru
      _
    // Predicated region
    $region30: #{mlp_forward.1} parent=1 // pred_check
      _
    $region31: #{mlp_forward.1} parent=1 // pred_check_branch
      %73 = sbr.rel (0) target = $region33
    $region32: #{mlp_forward.1} parent=1 // pred_region
      %75 = dma.done [#allocation6], 16
    $region33: #{mlp_forward.1} parent=1 // pred_fallthru
      _
    // Predicated region
    $region34: #{mlp_forward.1} parent=1 // pred_check
      _
    $region35: #{mlp_forward.1} parent=1 // pred_check_branch
      %77 = sbr.rel (0) target = $region37
    $region36: #{mlp_forward.1} parent=1 // pred_region
      %79 = dma.done [#allocation9], 1024
    $region37: #{mlp_forward.1} parent=1 // pred_fallthru
      _
    %v80 = vld [vmem:[#allocation2] sm:$0xff]
    %v81 = vld [vmem:[#allocation2 + $0x8] sm:$0xff]
    %v82 = vpack.c.bf16 %v80, %v80
    %v83 = vpack.c.bf16 %v81, %v81
    %v84 = vld [vmem:[#allocation5] sm:$0xf]
    %v85 = vld [vmem:[#allocation5 + $0x4] sm:$0xf]
    %v86 = vld [vmem:[#allocation5 + $0x8] sm:$0xf]
    %v87 = vld [vmem:[#allocation5 + $0xc] sm:$0xf]
    %v88 = vld [vmem:[#allocation5 + $0x10] sm:$0xf]
    %v89 = vld [vmem:[#allocation5 + $0x14] sm:$0xf]
    %v90 = vld [vmem:[#allocation5 + $0x18] sm:$0xf]
    %v91 = vld [vmem:[#allocation5 + $0x1c] sm:$0xf]
    %v92 = vld [vmem:[#allocation5 + $0x20] sm:$0xf]
    %v93 = vld [vmem:[#allocation5 + $0x24] sm:$0xf]
    %v94 = vld [vmem:[#allocation5 + $0x28] sm:$0xf]
    %v95 = vld [vmem:[#allocation5 + $0x2c] sm:$0xf]
    %v96 = vld [vmem:[#allocation5 + $0x30] sm:$0xf]
    %v97 = vld [vmem:[#allocation5 + $0x34] sm:$0xf]
    %v98 = vld [vmem:[#allocation5 + $0x38] sm:$0xf]
    %v99 = vld [vmem:[#allocation5 + $0x3c] sm:$0xf]
    %v100 = vld [vmem:[#allocation5 + $0x40] sm:$0xf]
    %v101 = vld [vmem:[#allocation5 + $0x44] sm:$0xf]
    %v102 = vld [vmem:[#allocation5 + $0x48] sm:$0xf]
    %v103 = vld [vmem:[#allocation5 + $0x4c] sm:$0xf]
    %v104 = vld [vmem:[#allocation5 + $0x50] sm:$0xf]
    %v105 = vld [vmem:[#allocation5 + $0x54] sm:$0xf]
    %v106 = vld [vmem:[#allocation5 + $0x58] sm:$0xf]
    %v107 = vld [vmem:[#allocation5 + $0x5c] sm:$0xf]
    %v108 = vld [vmem:[#allocation5 + $0x60] sm:$0xf]
    %v109 = vld [vmem:[#allocation5 + $0x64] sm:$0xf]
    %v110 = vld [vmem:[#allocation5 + $0x68] sm:$0xf]
    %v111 = vld [vmem:[#allocation5 + $0x6c] sm:$0xf]
    %v112 = vld [vmem:[#allocation5 + $0x70] sm:$0xf]
    %v113 = vld [vmem:[#allocation5 + $0x74] sm:$0xf]
    %v114 = vld [vmem:[#allocation5 + $0x78] sm:$0xf]
    %v115 = vld [vmem:[#allocation5 + $0x7c] sm:$0xf]
    %v116 = vld [vmem:[#allocation7] sm:$0x1]
    %v118 = vperm.slane %v116, 0
    %v152 = vunpack.c.l.b16 %v84
    %v153 = vunpack.c.l.b16 %v85
    %v154 = vunpack.c.l.b16 %v86
    %v155 = vunpack.c.l.b16 %v87
    %v156 = vunpack.c.l.b16 %v88
    %v157 = vunpack.c.l.b16 %v89
    %v158 = vunpack.c.l.b16 %v90
    %v159 = vunpack.c.l.b16 %v91
    %v160 = vunpack.c.l.b16 %v92
    %v161 = vunpack.c.l.b16 %v93
    %v162 = vunpack.c.l.b16 %v94
    %v163 = vunpack.c.l.b16 %v95
    %v164 = vunpack.c.l.b16 %v96
    %v165 = vunpack.c.l.b16 %v97
    %v166 = vunpack.c.l.b16 %v98
    %v167 = vunpack.c.l.b16 %v99
    %v168 = vunpack.c.l.b16 %v100
    %v169 = vunpack.c.l.b16 %v101
    %v170 = vunpack.c.l.b16 %v102
    %v171 = vunpack.c.l.b16 %v103
    %v172 = vunpack.c.l.b16 %v104
    %v173 = vunpack.c.l.b16 %v105
    %v174 = vunpack.c.l.b16 %v106
    %v175 = vunpack.c.l.b16 %v107
    %v176 = vunpack.c.l.b16 %v108
    %v177 = vunpack.c.l.b16 %v109
    %v178 = vunpack.c.l.b16 %v110
    %v179 = vunpack.c.l.b16 %v111
    %v180 = vunpack.c.l.b16 %v112
    %v181 = vunpack.c.l.b16 %v113
    %v182 = vunpack.c.l.b16 %v114
    %v183 = vunpack.c.l.b16 %v115
    %v184 = vpack.c.b16 %v153, %v152
    %v185 = vpack.c.b16 %v155, %v154
    %v186 = vpack.c.b16 %v157, %v156
    %v187 = vpack.c.b16 %v159, %v158
    %v188 = vpack.c.b16 %v161, %v160
    %v189 = vpack.c.b16 %v163, %v162
    %v190 = vpack.c.b16 %v165, %v164
    %v191 = vpack.c.b16 %v167, %v166
    %v192 = vpack.c.b16 %v169, %v168
    %v193 = vpack.c.b16 %v171, %v170
    %v194 = vpack.c.b16 %v173, %v172
    %v195 = vpack.c.b16 %v175, %v174
    %v196 = vpack.c.b16 %v177, %v176
    %v197 = vpack.c.b16 %v179, %v178
    %v198 = vpack.c.b16 %v181, %v180
    %v199 = vpack.c.b16 %v183, %v182
    %216 = vmatpush.bf16.msra.mxu0 %v191
    %217 = vmatpush.bf16.msra.mxu0 %v190
    %218 = vmatpush.bf16.msra.mxu0 %v189
    %219 = vmatpush.bf16.msra.mxu0 %v188
    %220 = vmatpush.bf16.msra.mxu0 %v187
    %221 = vmatpush.bf16.msra.mxu0 %v186
    %222 = vmatpush.bf16.msra.mxu0 %v185
    %223 = vmatpush.bf16.msra.mxu0 %v184
    %224 = vmatmul.bf16.gmra.mxu0 %v82
    %v225 = vpop.f32.mrf.mxu0
    %v226 = vadd.f32 %v118, %v225
    %v227 = vpop.f32.mrf.mxu0
    %228 = vdwg.mxu0
    %229 = vmatpush.bf16.msra.mxu0 %v199
    %230 = vmatpush.bf16.msra.mxu0 %v198
    %231 = vmatpush.bf16.msra.mxu0 %v197
    %232 = vmatpush.bf16.msra.mxu0 %v196
    %233 = vmatpush.bf16.msra.mxu0 %v195
    %234 = vmatpush.bf16.msra.mxu0 %v194
    %235 = vmatpush.bf16.msra.mxu0 %v193
    %236 = vmatpush.bf16.msra.mxu0 %v192
    %237 = vmatmul.bf16.gmra.mxu0 %v83
    %v238 = vpop.f32.mrf.mxu0
    %v239 = vadd.f32 %v226, %v238
    %v240 = vpop.f32.mrf.mxu0
    %241 = vdwg.mxu0
    %v242 = vmax.f32 %v239, 0.0
    %v243 = vpack.c.bf16 %v242, %v242
    %v244 = vld [vmem:[#allocation8] sm:$0xf]
    %v245 = vld [vmem:[#allocation8 + $0x4] sm:$0xf]
    %v246 = vld [vmem:[#allocation8 + $0x8] sm:$0xf]
    %v247 = vld [vmem:[#allocation8 + $0xc] sm:$0xf]
    %v248 = vld [vmem:[#allocation8 + $0x10] sm:$0xf]
    %v249 = vld [vmem:[#allocation8 + $0x14] sm:$0xf]
    %v250 = vld [vmem:[#allocation8 + $0x18] sm:$0xf]
    %v251 = vld [vmem:[#allocation8 + $0x1c] sm:$0xf]
    %v252 = vld [vmem:[#allocation8 + $0x20] sm:$0xf]
    %v253 = vld [vmem:[#allocation8 + $0x24] sm:$0xf]
    %v254 = vld [vmem:[#allocation8 + $0x28] sm:$0xf]
    %v255 = vld [vmem:[#allocation8 + $0x2c] sm:$0xf]
    %v256 = vld [vmem:[#allocation8 + $0x30] sm:$0xf]
    %v257 = vld [vmem:[#allocation8 + $0x34] sm:$0xf]
    %v258 = vld [vmem:[#allocation8 + $0x38] sm:$0xf]
    %v259 = vld [vmem:[#allocation8 + $0x3c] sm:$0xf]
    %v260 = vld [vmem:[%s4] sm:$0x1]
    %v262 = vperm.slane %v260, 0
    %v280 = vunpack.c.l.b16 %v244
    %v281 = vunpack.c.l.b16 %v245
    %v282 = vunpack.c.l.b16 %v246
    %v283 = vunpack.c.l.b16 %v247
    %v284 = vunpack.c.l.b16 %v248
    %v285 = vunpack.c.l.b16 %v249
    %v286 = vunpack.c.l.b16 %v250
    %v287 = vunpack.c.l.b16 %v251
    %v288 = vunpack.c.l.b16 %v252
    %v289 = vunpack.c.l.b16 %v253
    %v290 = vunpack.c.l.b16 %v254
    %v291 = vunpack.c.l.b16 %v255
    %v292 = vunpack.c.l.b16 %v256
    %v293 = vunpack.c.l.b16 %v257
    %v294 = vunpack.c.l.b16 %v258
    %v295 = vunpack.c.l.b16 %v259
    %v296 = vpack.c.b16 %v281, %v280
    %v297 = vpack.c.b16 %v283, %v282
    %v298 = vpack.c.b16 %v285, %v284
    %v299 = vpack.c.b16 %v287, %v286
    %v300 = vpack.c.b16 %v289, %v288
    %v301 = vpack.c.b16 %v291, %v290
    %v302 = vpack.c.b16 %v293, %v292
    %v303 = vpack.c.b16 %v295, %v294
    %312 = vmatpush.bf16.msra.mxu0 %v303
    %313 = vmatpush.bf16.msra.mxu0 %v302
    %314 = vmatpush.bf16.msra.mxu0 %v301
    %315 = vmatpush.bf16.msra.mxu0 %v300
    %316 = vmatpush.bf16.msra.mxu0 %v299
    %317 = vmatpush.bf16.msra.mxu0 %v298
    %318 = vmatpush.bf16.msra.mxu0 %v297
    %319 = vmatpush.bf16.msra.mxu0 %v296
    %320 = vmatmul.bf16.gmra.mxu0 %v243
    %v321 = vpop.f32.mrf.mxu0
    %v322 = vadd.f32 %v262, %v321
    %v323 = vpop.f32.mrf.mxu0
    %324 = vdwg.mxu0
    %325 = vst [vmem:[#allocation10] sm:$0xff] %v322
    // Predicated region
    $region38: #{mlp_forward.1} parent=1 // pred_check
      _
    $region39: #{mlp_forward.1} parent=1 // pred_check_branch
      %327 = sbr.rel (0) target = $region41
    $region40: #{mlp_forward.1} parent=1 // pred_region
      %329 = vsyncadd [#allocation4], 0
      %s331 = sshll.u32 [#allocation10], 4
      %s332 = int_to_ptr.vmem [resolvable:$true] %s331
      %s333 = sshll.u32 %s5, 4
      %s334 = int_to_ptr.hbm [resolvable:$true] %s333
      %336 = dma.vmem_to_hbm [thread:$0]  %s332, 128, %s334, [#allocation4]
    $region41: #{mlp_forward.1} parent=1 // pred_fallthru
      _
    // Predicated region
    $region42: #{mlp_forward.1} parent=1 // pred_check
      _
    $region43: #{mlp_forward.1} parent=1 // pred_check_branch
      %338 = sbr.rel (0) target = $region45
    $region44: #{mlp_forward.1} parent=1 // pred_region
      %340 = dma.done [#allocation4], 128
    $region45: #{mlp_forward.1} parent=1 // pred_fallthru
      _
    %341 = vsyncpa [#allocation3], 1
    %342 = vsyncpa [#allocation6], 1
    %343 = vsyncpa [#allocation9], 1
    %344 = vsyncpa [#allocation4], 1

</llo_original>
